<compile_context>
chip_gen: v7x
topology: tpu7x:2x2x1
jax: 0.10.0
libtpu: 0.0.40
codegen_flags: <defaults>
</compile_context>

<pallas_src>
import jax
import jax.numpy as jnp
from jax import lax
from jax.experimental import pallas as pl
from jax.experimental.pallas import tpu as pltpu


def _num_tensorcores():
    """Best-effort TensorCores-per-chip (v7x megacore = 2; v5e/v6e = 1)."""
    try:
        kind = str(getattr(jax.devices()[0], "device_kind", "")).lower()
        if "v7" in kind or "7x" in kind:
            return 2
    except Exception:
        pass
    return 1


def _pick_c_blk(n_cls, n_suf, seq, ctx_dim, itemsize, vmem_budget_bytes, num_cores):
    """Classes per grid step: as large as the double-buffered VMEM budget allows."""
    # Bytes per class per step: prefix + suffix inputs and the full prompt-row output,
    # x2 for BlockSpec double-buffering.
    per_class = (1 + n_suf + seq) * ctx_dim * itemsize * 2
    c_blk = max(1, int(vmem_budget_bytes // max(per_class, 1)))
    c_blk = min(c_blk, n_cls)
    # Only split the grid when there is a second TensorCore to shard onto (v7x). On
    # single-TC v5e/v6e the grid is a serial loop, so extra steps are pure overhead.
    if num_cores > 1 and n_cls > 1:
        c_blk = min(c_blk, -(-n_cls // num_cores))
    return max(1, c_blk)


def _make_kernel(c_blk, n_ctx, n_suf):
    """Kernel closed over static block geometry."""

    def kernel(ctx_ref, prefix_ref, suffix_ref, out_ref):
        # ctx_ref:    (n_ctx, D)        -- constant block index: VMEM-resident across grid
        # prefix_ref: (c_blk, 1, D)     -- SOS embedding for this class block
        # suffix_ref: (c_blk, n_suf, D) -- class name + EOS + pad for this class block
        # out_ref:    (c_blk, seq, D)   -- assembled prompts for this class block
        out_ref[:, 0:1, :] = prefix_ref[...]            # SOS row (row 0)
        out_ref[:, 1 + n_ctx:, :] = suffix_ref[...]     # name + EOS + padding rows

        # Learned context rows 1..n_ctx are identical for every class: write them per class
        # from the small (vreg-resident) ctx tile; avoids materializing a (c_blk, n_ctx, D)
        # broadcast that would spill through VMEM for real CoOp shapes.
        ctx_row = ctx_ref[...][None, :, :]              # (1, n_ctx, D)

        def _write_ctx(c, carry):
            out_ref[pl.ds(c, 1), 1:1 + n_ctx, :] = ctx_row
            return carry

        lax.fori_loop(0, c_blk, _write_ctx, 0, unroll=False)

    return kernel


def text_prompt_learner_forward(ctx, token_prefix, token_suffix, *,
                                vmem_budget_bytes=8 * 1024 * 1024,
                                out_dtype=None,
                                num_tensorcores=None):
    """Pallas implementation of TextPromptLearner.forward() for ctx_position='end'.

    Args:
      ctx:          (n_ctx, ctx_dim)         learned context vectors
      token_prefix: (n_cls, 1, ctx_dim)      SOS embeddings
      token_suffix: (n_cls, n_suf, ctx_dim)  class-name/EOS/pad embeddings
    Returns:
      prompts:      (n_cls, 1 + n_ctx + n_suf, ctx_dim) in the embedding dtype.
    """
    n_ctx, ctx_dim = ctx.shape
    n_cls, pre_one, pre_d = token_prefix.shape
    n_suf = token_suffix.shape[1]
    assert pre_one == 1 and pre_d == ctx_dim and token_suffix.shape[2] == ctx_dim
    assert n_suf >= 1, "suffix must contain at least the EOS token"
    seq = 1 + n_ctx + n_suf

    # Keep prompts in the CLIP embedding dtype (as the PyTorch module does): cast the tiny
    # learned ctx down rather than upcasting the big prefix/suffix embeddings.
    if out_dtype is None:
        out_dtype = token_prefix.dtype
    out_dtype = jnp.dtype(out_dtype)
    ctx = ctx.astype(out_dtype)
    token_prefix = token_prefix.astype(out_dtype)
    token_suffix = token_suffix.astype(out_dtype)

    if num_tensorcores is None:
        num_tensorcores = _num_tensorcores()

    itemsize = out_dtype.itemsize
    c_blk = _pick_c_blk(n_cls, n_suf, seq, ctx_dim, itemsize,
                        vmem_budget_bytes, num_tensorcores)
    grid = (pl.cdiv(n_cls, c_blk),)

    # Pure copy: advisory byte count so XLA overlaps this custom call with its neighbors.
    bytes_accessed = (n_cls * (1 + n_suf)    # prefix + suffix read
                      + n_ctx                # ctx read (once)
                      + n_cls * seq          # prompts written
                      ) * ctx_dim * itemsize

    kernel = _make_kernel(c_blk, n_ctx, n_suf)

    out = pl.pallas_call(
        kernel,
        out_shape=jax.ShapeDtypeStruct((n_cls, seq, ctx_dim), out_dtype),
        grid_spec=pltpu.PrefetchScalarGridSpec(
            num_scalar_prefetch=0,
            grid=grid,
            in_specs=[
                # ctx: constant block index -> DMA'd once, stays VMEM-resident.
                pl.BlockSpec((n_ctx, ctx_dim), lambda i: (0, 0)),
                # per-class-block prefix rows.
                pl.BlockSpec((c_blk, 1, ctx_dim), lambda i: (i, 0, 0)),
                # per-class-block suffix rows.
                pl.BlockSpec((c_blk, n_suf, ctx_dim), lambda i: (i, 0, 0)),
            ],
            out_specs=pl.BlockSpec((c_blk, seq, ctx_dim), lambda i: (i, 0, 0)),
        ),
        compiler_params=pltpu.CompilerParams(
            dimension_semantics=("parallel",),
        ),
        cost_estimate=pl.CostEstimate(flops=0, transcendentals=0,
                                      bytes_accessed=int(bytes_accessed)),
    )(ctx, token_prefix, token_suffix)

    return out


if __name__ == "__main__":
    def run_case(n_cls, n_ctx, ctx_dim, seq, emb_dtype, key, **kw):
        n_suf = seq - 1 - n_ctx
        k_ctx, k_pre, k_suf = jax.random.split(key, 3)
        # nn.init.normal_(ctx_vectors, std=0.02); learned ctx kept fp32 to exercise the
        # cast-down path when embeddings are low precision.
        ctx = 0.02 * jax.random.normal(k_ctx, (n_ctx, ctx_dim), dtype=jnp.float32)
        token_prefix = jax.random.normal(k_pre, (n_cls, 1, ctx_dim)).astype(emb_dtype)
        token_suffix = jax.random.normal(k_suf, (n_cls, n_suf, ctx_dim)).astype(emb_dtype)

        prompts = text_prompt_learner_forward(ctx, token_prefix, token_suffix, **kw)
        prompts = jax.block_until_ready(prompts)

        # Pure-JAX reference (same as torch.cat([prefix, ctx_expanded, suffix], dim=-2)).
        ctx_cast = ctx.astype(emb_dtype)
        ref = jnp.concatenate(
            [token_prefix,
             jnp.broadcast_to(ctx_cast[None, :, :], (n_cls, n_ctx, ctx_dim)),
             token_suffix], axis=-2)

        assert prompts.shape == (n_cls, seq, ctx_dim), prompts.shape
        assert prompts.dtype == jnp.dtype(emb_dtype), prompts.dtype
        assert jnp.array_equal(prompts, ref), "Pallas output mismatch vs reference"

    key = jax.random.PRNGKey(0)
    k1, k2 = jax.random.split(key)

    # Case 1: fp32 embeddings, class block covering all classes (single grid step).
    run_case(n_cls=11, n_ctx=4, ctx_dim=128, seq=16, emb_dtype=jnp.float32, key=k1)

    # Case 2: bf16 embeddings + fp32 learned ctx (output stays bf16), tiny VMEM budget to
    # force a multi-step grid with a ragged (partially-filled) last class block.
    run_case(n_cls=13, n_ctx=4, ctx_dim=128, seq=16, emb_dtype=jnp.bfloat16, key=k2,
             vmem_budget_bytes=64 * 1024)

    print("KERNEL_OK")
</pallas_src>

<mosaic_0001>
module attributes {stable_mosaic.version = 11 : i64} {
  func.func @kernel(%arg0: i32, %arg1: memref<4x128xf32, #tpu.memory_space<vmem>>, %arg2: memref<11x1x128xf32, #tpu.memory_space<vmem>>, %arg3: memref<11x11x128xf32, #tpu.memory_space<vmem>>, %arg4: memref<11x16x128xf32, #tpu.memory_space<vmem>>) attributes {dimension_semantics = [#tpu.dimension_semantics<parallel>], iteration_bounds = array<i64: 1>, scalar_prefetch = 0 : i64, scratch_operands = 0 : i64, tpu.core_type = #tpu.core_type<tc>, window_params = [{pipeline_mode = #tpu.pipeline_mode<synchronous>, transform_indices = @transform_0, window_bounds = array<i64: 4, 128>}, {transform_indices = @transform_1, window_bounds = array<i64: 11, 1, 128>}, {transform_indices = @transform_2, window_bounds = array<i64: 11, 11, 128>}, {transform_indices = @transform_3, window_bounds = array<i64: 11, 16, 128>}]} {
    %c0 = arith.constant 0 : index
    %c0_0 = arith.constant 0 : index
    %c0_1 = arith.constant 0 : index
    %0 = vector.load %arg2[%c0, %c0_0, %c0_1] : memref<11x1x128xf32, #tpu.memory_space<vmem>>, vector<11x1x128xf32>
    %c0_2 = arith.constant 0 : index
    %c0_3 = arith.constant 0 : index
    %c0_4 = arith.constant 0 : index
    %1 = vector.load %arg4[%c0_2, %c0_3, %c0_4] : memref<11x16x128xf32, #tpu.memory_space<vmem>>, vector<11x1x128xf32>
    tpu.vector_store %arg4[%c0_2, %c0_3, %c0_4], %0 {strides = array<i32>} : memref<11x16x128xf32, #tpu.memory_space<vmem>>, vector<11x1x128xf32>,
    %c0_5 = arith.constant 0 : index
    %c0_6 = arith.constant 0 : index
    %c0_7 = arith.constant 0 : index
    %2 = vector.load %arg3[%c0_5, %c0_6, %c0_7] : memref<11x11x128xf32, #tpu.memory_space<vmem>>, vector<11x11x128xf32>
    %c0_8 = arith.constant 0 : index
    %c5 = arith.constant 5 : index
    %c0_9 = arith.constant 0 : index
    %3 = vector.load %arg4[%c0_8, %c5, %c0_9] : memref<11x16x128xf32, #tpu.memory_space<vmem>>, vector<11x11x128xf32>
    tpu.vector_store %arg4[%c0_8, %c5, %c0_9], %2 {strides = array<i32>} : memref<11x16x128xf32, #tpu.memory_space<vmem>>, vector<11x11x128xf32>,
    %c0_10 = arith.constant 0 : index
    %c0_11 = arith.constant 0 : index
    %4 = vector.load %arg1[%c0_10, %c0_11] : memref<4x128xf32, #tpu.memory_space<vmem>>, vector<4x128xf32>
    %5 = vector.shape_cast %4 : vector<4x128xf32> to vector<1x4x128xf32>
    %c0_i32 = arith.constant 0 : i32
    %c11_i32 = arith.constant 11 : i32
    %6 = arith.addi %c0_i32, %c11_i32 : i32
    %c1_i32 = arith.constant 1 : i32
    scf.for %arg5 = %c0_i32 to %6 step %c1_i32  : i32 {
      %7 = arith.index_cast %arg5 : i32 to index
      %c1 = arith.constant 1 : index
      %c0_13 = arith.constant 0 : index
      %8 = vector.load %arg4[%7, %c1, %c0_13] : memref<11x16x128xf32, #tpu.memory_space<vmem>>, vector<1x4x128xf32>
      tpu.vector_store %arg4[%7, %c1, %c0_13], %5 {strides = array<i32>} : memref<11x16x128xf32, #tpu.memory_space<vmem>>, vector<1x4x128xf32>,
    }
    %c11_i32_12 = arith.constant 11 : i32
    return
  }
  func.func @transform_0(%arg0: i32) -> (i32, i32) {
    %c0_i32 = arith.constant 0 : i32
    %c0_i32_0 = arith.constant 0 : i32
    %c0_i32_1 = arith.constant 0 : i32
    return %c0_i32, %c0_i32_0 : i32, i32
  }
  func.func @transform_1(%arg0: i32) -> (i32, i32, i32) {
    %c0_i32 = arith.constant 0 : i32
    %c0_i32_0 = arith.constant 0 : i32
    %c0_i32_1 = arith.constant 0 : i32
    return %arg0, %c0_i32, %c0_i32_0 : i32, i32, i32
  }
  func.func @transform_2(%arg0: i32) -> (i32, i32, i32) {
    %c0_i32 = arith.constant 0 : i32
    %c0_i32_0 = arith.constant 0 : i32
    %c0_i32_1 = arith.constant 0 : i32
    return %arg0, %c0_i32, %c0_i32_0 : i32, i32, i32
  }
  func.func @transform_3(%arg0: i32) -> (i32, i32, i32) {
    %c0_i32 = arith.constant 0 : i32
    %c0_i32_0 = arith.constant 0 : i32
    %c0_i32_1 = arith.constant 0 : i32
    return %arg0, %c0_i32, %c0_i32_0 : i32, i32, i32
  }
}

</mosaic_0001>

<llo_original>
// kernel: tpu_custom_call.1
$region0: #{tpu_custom_call.1}
  #allocation0 [shape = 'u32[]', space=smem, size = 0x4, offset = 0x4, fixed_abs, tag = 'smem constant byte address 0x4 - core index']
  #allocation1 [shape = 'u32[144,128]{1,0:T(1,128)}', space=vmem, size = 0x12000, scoped, tag = 'internal scratch']
  %s0 = inlined_call_operand.hbm [shape: f32[4,128], index: 0, kind: input, shape index: {}]
  %s1 = inlined_call_operand.hbm [shape: f32[11,1,128], index: 1, kind: input, shape index: {}]
  %s2 = inlined_call_operand.hbm [shape: f32[11,11,128], index: 2, kind: input, shape index: {}]
  %s3 = inlined_call_operand.hbm [shape: f32[11,16,128], index: 3, kind: output, shape index: {}]
  %s4 = sld [smem:[#allocation0]]
  $region41: #{tpu_custom_call.1} parent=0
    _
  %s6 = ssub.s32 1, %s4
  %s7 = scalar_select 0, %s6, %s4
  $region1: #{tpu_custom_call.1} parent=0
    #allocation2 [shape = 'u8[2048]{0}', space=vmem, size = 0x800, scoped, tag = 'input window, operand 0, single buffered']
    #allocation3 [shape = 's32[1]{0}', space=sflag, size = 0x4, scoped, tag = 'scoped memory for tpu_custom_call.1']
    #allocation4 [shape = 's32[1]{0}', space=sflag, size = 0x4, scoped, tag = 'scoped memory for tpu_custom_call.1']
    #allocation5 [shape = 'u8[5632]{0}', space=vmem, size = 0x1800, scoped, tag = 'input window, operand 1, single buffered']
    #allocation6 [shape = 's32[1]{0}', space=sflag, size = 0x4, scoped, tag = 'scoped memory for tpu_custom_call.1']
    #allocation7 [shape = 'u8[90112]{0}', space=vmem, size = 0x16000, scoped, tag = 'input window, operand 2, single buffered']
    #allocation8 [shape = 'u8[90112]{0}', space=vmem, size = 0x16000, scoped, tag = 'output window, operand 0, single buffered']
    %8 = vsyncpa [#allocation3], 0
    %9 = vsyncpa [#allocation6], 0
    %10 = vsyncpa [#allocation4], 0
    // Predicated region
    $region2: #{tpu_custom_call.1} parent=1 // pred_check
      _
    $region3: #{tpu_custom_call.1} parent=1 // pred_check_branch
      %12 = sbr.rel (0) target = $region5
    $region4: #{tpu_custom_call.1} parent=1 // pred_region
      %s14 = ssub.s32 64, 64
      %15 = vsyncadd [#allocation3], %s14
      %s17 = sshll.u32 [#allocation2], 4
      %s18 = int_to_ptr.vmem [resolvable:$true] %s17
      %20 = dma.hbm_to_vmem [thread:$0]  %s0, 64, %s18, [#allocation3]
    $region5: #{tpu_custom_call.1} parent=1 // pred_fallthru
      _
    // Predicated region
    $region6: #{tpu_custom_call.1} parent=1 // pred_check
      _
    $region7: #{tpu_custom_call.1} parent=1 // pred_check_branch
      %22 = sbr.rel (0) target = $region9
    $region8: #{tpu_custom_call.1} parent=1 // pred_region
      %s24 = ssub.s32 176, 176
      %25 = vsyncadd [#allocation6], %s24
      %s26 = sshll.u32 [#allocation5], 4
      %s27 = int_to_ptr.vmem [resolvable:$true] %s26
      %32 = dma.hbm_to_vmem [thread:$0]  %s1, 176, %s27, [#allocation6], 16, 16, 1
    $region9: #{tpu_custom_call.1} parent=1 // pred_fallthru
      _
    // Predicated region
    $region10: #{tpu_custom_call.1} parent=1 // pred_check
      _
    $region11: #{tpu_custom_call.1} parent=1 // pred_check_branch
      %34 = sbr.rel (0) target = $region13
    $region12: #{tpu_custom_call.1} parent=1 // pred_region
      %s36 = ssub.s32 2816, 2816
      %37 = vsyncadd [#allocation6], %s36
      %s38 = sshll.u32 [#allocation7], 4
      %s39 = int_to_ptr.vmem [resolvable:$true] %s38
      %44 = dma.hbm_to_vmem [thread:$0]  %s2, 2816, %s39, [#allocation6], 128, 128, 8
    $region13: #{tpu_custom_call.1} parent=1 // pred_fallthru
      _
    // Predicated region
    $region14: #{tpu_custom_call.1} parent=1 // pred_check
      _
    $region15: #{tpu_custom_call.1} parent=1 // pred_check_branch
      %46 = sbr.rel (0) target = $region17
    $region16: #{tpu_custom_call.1} parent=1 // pred_region
      %47 = dma.done [#allocation3], 64
    $region17: #{tpu_custom_call.1} parent=1 // pred_fallthru
      _
    // Predicated region
    $region18: #{tpu_custom_call.1} parent=1 // pred_check
      _
    $region19: #{tpu_custom_call.1} parent=1 // pred_check_branch
      %49 = sbr.rel (0) target = $region21
    $region20: #{tpu_custom_call.1} parent=1 // pred_region
      %50 = dma.done [#allocation6], 176
    $region21: #{tpu_custom_call.1} parent=1 // pred_fallthru
      _
    // Predicated region
    $region22: #{tpu_custom_call.1} parent=1 // pred_check
      _
    $region23: #{tpu_custom_call.1} parent=1 // pred_check_branch
      %52 = sbr.rel (0) target = $region25
    $region24: #{tpu_custom_call.1} parent=1 // pred_region
      %53 = dma.done [#allocation6], 2816
    $region25: #{tpu_custom_call.1} parent=1 // pred_fallthru
      _
    %v54 = vld [vmem:[#allocation5] sm:$0x1]
    %v55 = vld [vmem:[#allocation5 + $0x1] sm:$0x1]
    %v56 = vld [vmem:[#allocation5 + $0x2] sm:$0x1]
    %v57 = vld [vmem:[#allocation5 + $0x3] sm:$0x1]
    %v58 = vld [vmem:[#allocation5 + $0x4] sm:$0x1]
    %v59 = vld [vmem:[#allocation5 + $0x5] sm:$0x1]
    %v60 = vld [vmem:[#allocation5 + $0x6] sm:$0x1]
    %v61 = vld [vmem:[#allocation5 + $0x7] sm:$0x1]
    %v62 = vld [vmem:[#allocation5 + $0x8] sm:$0x1]
    %v63 = vld [vmem:[#allocation5 + $0x9] sm:$0x1]
    %v64 = vld [vmem:[#allocation5 + $0xa] sm:$0x1]
    %65 = vst [vmem:[#allocation8] sm:$0x1] %v54
    %66 = vst [vmem:[#allocation8 + $0x10] sm:$0x1] %v55
    %67 = vst [vmem:[#allocation8 + $0x20] sm:$0x1] %v56
    %68 = vst [vmem:[#allocation8 + $0x30] sm:$0x1] %v57
    %69 = vst [vmem:[#allocation8 + $0x40] sm:$0x1] %v58
    %70 = vst [vmem:[#allocation8 + $0x50] sm:$0x1] %v59
    %71 = vst [vmem:[#allocation8 + $0x60] sm:$0x1] %v60
    %72 = vst [vmem:[#allocation8 + $0x70] sm:$0x1] %v61
    %73 = vst [vmem:[#allocation8 + $0x80] sm:$0x1] %v62
    %74 = vst [vmem:[#allocation8 + $0x90] sm:$0x1] %v63
    %75 = vst [vmem:[#allocation8 + $0xa0] sm:$0x1] %v64
    %v76 = vld [vmem:[#allocation7] sm:$0xff]
    %v77 = vld [vmem:[#allocation7 + $0x8] sm:$0x7]
    %v78 = vld [vmem:[#allocation7 + $0x10] sm:$0xff]
    %v79 = vld [vmem:[#allocation7 + $0x18] sm:$0x7]
    %v80 = vld [vmem:[#allocation7 + $0x20] sm:$0xff]
    %v81 = vld [vmem:[#allocation7 + $0x28] sm:$0x7]
    %v82 = vld [vmem:[#allocation7 + $0x30] sm:$0xff]
    %v83 = vld [vmem:[#allocation7 + $0x38] sm:$0x7]
    %v84 = vld [vmem:[#allocation7 + $0x40] sm:$0xff]
    %v85 = vld [vmem:[#allocation7 + $0x48] sm:$0x7]
    %v86 = vld [vmem:[#allocation7 + $0x50] sm:$0xff]
    %v87 = vld [vmem:[#allocation7 + $0x58] sm:$0x7]
    %v88 = vld [vmem:[#allocation7 + $0x60] sm:$0xff]
    %v89 = vld [vmem:[#allocation7 + $0x68] sm:$0x7]
    %v90 = vld [vmem:[#allocation7 + $0x70] sm:$0xff]
    %v91 = vld [vmem:[#allocation7 + $0x78] sm:$0x7]
    %v92 = vld [vmem:[#allocation7 + $0x80] sm:$0xff]
    %v93 = vld [vmem:[#allocation7 + $0x88] sm:$0x7]
    %v94 = vld [vmem:[#allocation7 + $0x90] sm:$0xff]
    %v95 = vld [vmem:[#allocation7 + $0x98] sm:$0x7]
    %v96 = vld [vmem:[#allocation7 + $0xa0] sm:$0xff]
    %v97 = vld [vmem:[#allocation7 + $0xa8] sm:$0x7]
    %98 = vst [vmem:[#allocation8 + $0x5] sm:$0xff] %v76
    %99 = vst [vmem:[#allocation8 + $0xd] sm:$0x7] %v77
    %100 = vst [vmem:[#allocation8 + $0x15] sm:$0xff] %v78
    %101 = vst [vmem:[#allocation8 + $0x1d] sm:$0x7] %v79
    %102 = vst [vmem:[#allocation8 + $0x25] sm:$0xff] %v80
    %103 = vst [vmem:[#allocation8 + $0x2d] sm:$0x7] %v81
    %104 = vst [vmem:[#allocation8 + $0x35] sm:$0xff] %v82
    %105 = vst [vmem:[#allocation8 + $0x3d] sm:$0x7] %v83
    %106 = vst [vmem:[#allocation8 + $0x45] sm:$0xff] %v84
    %107 = vst [vmem:[#allocation8 + $0x4d] sm:$0x7] %v85
    %108 = vst [vmem:[#allocation8 + $0x55] sm:$0xff] %v86
    %109 = vst [vmem:[#allocation8 + $0x5d] sm:$0x7] %v87
    %110 = vst [vmem:[#allocation8 + $0x65] sm:$0xff] %v88
    %111 = vst [vmem:[#allocation8 + $0x6d] sm:$0x7] %v89
    %112 = vst [vmem:[#allocation8 + $0x75] sm:$0xff] %v90
    %113 = vst [vmem:[#allocation8 + $0x7d] sm:$0x7] %v91
    %114 = vst [vmem:[#allocation8 + $0x85] sm:$0xff] %v92
    %115 = vst [vmem:[#allocation8 + $0x8d] sm:$0x7] %v93
    %116 = vst [vmem:[#allocation8 + $0x95] sm:$0xff] %v94
    %117 = vst [vmem:[#allocation8 + $0x9d] sm:$0x7] %v95
    %118 = vst [vmem:[#allocation8 + $0xa5] sm:$0xff] %v96
    %119 = vst [vmem:[#allocation8 + $0xad] sm:$0x7] %v97
    %v120 = vld [vmem:[#allocation2] sm:$0xf]
    loop: start=0, step=1, limit=11
    $region26: #{tpu_custom_call.1} parent=1 // loop_pre_header
      _
    $region27: #{tpu_custom_call.1} parent=1 // loop_header
      %s122 = sphi 0, %s126
      %p123 = scmp.ge.s32.totalorder %s122, 11
    $region28: #{tpu_custom_call.1} parent=1 // loop_header_branch
      %125 = sbr.rel (%p123) target = $region32
    $region29: #{tpu_custom_call.1} parent=1 // loop_body
      %s127 = smul.u32 %s122, 16
      %s128 = scalar_lea.vmem [#allocation8], %s127
      %129 = vst [vmem:[%s128 + $0x1] sm:$0xf] %v120
    $region30: #{tpu_custom_call.1} parent=1 // loop_footer
      %s126 = sadd.s32 1, %s122
    $region31: #{tpu_custom_call.1} parent=1 // loop_footer_branch
      %121 = sbr.rel target = $region27
    $region32: #{tpu_custom_call.1} parent=1 // loop_exit
      _
    // Predicated region
    $region33: #{tpu_custom_call.1} parent=1 // pred_check
      _
    $region34: #{tpu_custom_call.1} parent=1 // pred_check_branch
      %131 = sbr.rel (0) target = $region36
    $region35: #{tpu_custom_call.1} parent=1 // pred_region
      %s133 = ssub.s32 2816, 2816
      %134 = vsyncadd [#allocation4], %s133
      %s135 = sshll.u32 [#allocation8], 4
      %s136 = int_to_ptr.vmem [resolvable:$true] %s135
      %141 = dma.vmem_to_hbm [thread:$0]  %s136, 2816, %s3, [#allocation4], 128, 128, 8
    $region36: #{tpu_custom_call.1} parent=1 // pred_fallthru
      _
    // Predicated region
    $region37: #{tpu_custom_call.1} parent=1 // pred_check
      _
    $region38: #{tpu_custom_call.1} parent=1 // pred_check_branch
      %143 = sbr.rel (0) target = $region40
    $region39: #{tpu_custom_call.1} parent=1 // pred_region
      %144 = dma.done [#allocation4], 2816
    $region40: #{tpu_custom_call.1} parent=1 // pred_fallthru
      _
    %145 = vsyncpa [#allocation3], 1
    %146 = vsyncpa [#allocation6], 1
    %147 = vsyncpa [#allocation4], 1

</llo_original>
